<compile_context>
chip_gen: v7x
topology: tpu7x:2x2x1
jax: 0.10.0
libtpu: 0.0.40
codegen_flags: <defaults>
</compile_context>

<pallas_src>
import functools

import jax
import jax.numpy as jnp
from jax import lax
from jax.experimental import pallas as pl
from jax.experimental.pallas import tpu as pltpu


_MiB = 1024 * 1024
# Per-output-buffer tile budget. The output is double-buffered, so VMEM cost is
# ~2x this plus internal scratch; vmem_limit_bytes is raised to match below.
_TILE_BUDGET_BYTES = 8 * _MiB
_MAX_TM = 1024


def _round_down(v, m):
    return (v // m) * m


def _sublane_quantum(dtype):
    itemsize = jnp.dtype(dtype).itemsize
    return max(8, 32 // max(itemsize, 1))  # 8 for f32, 16 for bf16, 32 for int8


def _pick_tiles(seq_len, dtype):
    """Aligned (tm, tn) tiles; ragged edge blocks are handled by a cdiv grid.

    tn is the full row (lane-dense unmasked stores, one col-tile) whenever a
    minimal-height slab fits the per-buffer budget; otherwise a multiple of 128.
    tm fills the remaining budget, aligned to the dtype's sublane quantum.
    Tile bytes never exceed _TILE_BUDGET_BYTES, regardless of T alignment.
    """
    itemsize = jnp.dtype(dtype).itemsize
    row_q = _sublane_quantum(dtype)
    lane_q = 128

    if seq_len * itemsize * row_q <= _TILE_BUDGET_BYTES or seq_len <= lane_q:
        tn = seq_len
    else:
        tn = _round_down(_TILE_BUDGET_BYTES // (row_q * itemsize), lane_q)
        tn = max(lane_q, min(tn, _round_down(seq_len, lane_q)))

    tm = _TILE_BUDGET_BYTES // (tn * itemsize)
    tm = max(row_q, _round_down(min(tm, _MAX_TM), row_q))
    if tm >= seq_len:
        tm = seq_len  # full extent is always a legal block shape
    return tm, tn


def _streaming_mask_kernel(xlen_ref, o_ref, *, left_context, band_width,
                           with_padding, tm, tn):
    """One grid step = one (tm, tn) tile of one batch element's (T, T) mask."""
    row0 = pl.program_id(0) * tm          # scalar unit
    b = pl.program_id(1)
    col0 = pl.program_id(2) * tn

    # Raw per-tile column index plane (iota must be >= 2D on TPU).
    cj = lax.broadcasted_iota(jnp.int32, (tm, tn), 1)

    if band_width < 0:
        # Degenerate contexts: the kept band is empty -> everything masked.
        mask = jnp.ones((tm, tn), dtype=jnp.bool_)
    else:
        ri = lax.broadcasted_iota(jnp.int32, (tm, tn), 0)
        # u = (j - i) + left_context; masked iff u < 0 or u > band_width.
        # Both band compares collapse into a single unsigned range check.
        band_off = (col0 - row0) + left_context          # scalar unit
        u = (cj - ri) + band_off
        mask = u.astype(jnp.uint32) > jnp.uint32(band_width)
        if with_padding:
            pad_thr = xlen_ref[b] - col0                 # scalar unit
            mask = mask | (cj >= pad_thr)

    o_ref[...] = mask.astype(o_ref.dtype)


def streaming_mask(x, x_len, *, left_context, right_context,
                   tile_m=None, tile_n=None):
    """Pallas implementation of StreamingMask.forward(x, x_len)."""
    seq_len = x.shape[-1]
    out_dtype = x.dtype
    itemsize = jnp.dtype(out_dtype).itemsize

    with_padding = x_len is not None
    if with_padding:
        x_len_arr = x_len.astype(jnp.int32)
    else:
        # No padding: PyTorch returns shape (1, 1, T, T); dummy scalar prefetch.
        x_len_arr = jnp.full((1,), seq_len, dtype=jnp.int32)
    batch = x_len_arr.shape[0]

    tm, tn = _pick_tiles(seq_len, out_dtype)
    if tile_m is not None:
        tm = tile_m
    if tile_n is not None:
        tn = tile_n

    # (row-tile, batch, col-tile): leading axis is usually >= 2 even at B == 1,
    # so "parallel" sharding splits cleanly across v7x's two TensorCores.
    grid = (pl.cdiv(seq_len, tm), batch, pl.cdiv(seq_len, tn))

    kernel = functools.partial(
        _streaming_mask_kernel,
        left_context=left_context,
        band_width=left_context + right_context,
        with_padding=with_padding,
        tm=tm,
        tn=tn,
    )

    grid_spec = pltpu.PrefetchScalarGridSpec(
        num_scalar_prefetch=1,              # x_len goes to SMEM, read per grid step
        grid=grid,
        in_specs=[],
        out_specs=pl.BlockSpec(
            (None, tm, tn),                 # batch dim squeezed -> kernel ref is (tm, tn)
            lambda ti, b, tj, xlen: (b, ti, tj),
        ),
    )

    # Output-only kernel: VMEM = 2 double-buffered output tiles + internal scratch.
    tile_bytes = tm * tn * itemsize
    vmem_limit = int(min(48 * _MiB, max(16 * _MiB, 2 * tile_bytes + 4 * _MiB)))

    out = pl.pallas_call(
        kernel,
        grid_spec=grid_spec,
        out_shape=jax.ShapeDtypeStruct((batch, seq_len, seq_len), out_dtype),
        compiler_params=pltpu.CompilerParams(
            dimension_semantics=("parallel", "parallel", "parallel"),
            vmem_limit_bytes=vmem_limit,
        ),
    )(x_len_arr)

    # Restore the (B, 1, T, T) layout outside the kernel (free metadata reshape).
    return out.reshape(batch, 1, seq_len, seq_len)

# TODO(synk): if the downstream attention kernel permits, emit int8/bool instead
# of x.dtype (4x less HBM traffic vs f32) or fuse this predicate into the
# attention kernel and never materialize the (B,1,T,T) mask at all.


def _reference(x, x_len, left_context, right_context):
    """Pure-JAX reference mirroring the PyTorch forward."""
    seq_len = x.shape[-1]
    i = jnp.arange(seq_len)[:, None]
    j = jnp.arange(seq_len)[None, :]
    right = (j - i) >= (1 + right_context)
    left = (j - i) < (-left_context)
    streaming = jnp.logical_or(right, left).astype(x.dtype)
    if x_len is None:
        return streaming[None, None, :, :]
    pad = (j[None, :, :] >= x_len[:, None, None]).astype(x.dtype)  # (B,1,T)
    return jnp.maximum(streaming[None, None, :, :], pad[:, None, :, :])


if __name__ == "__main__":
    key = jax.random.PRNGKey(0)
    left_context, right_context = 4, 2

    # Small shape consistent with the module's (B, C, T) input.
    batch, channels, seq = 2, 4, 16
    x = jax.random.normal(key, (batch, channels, seq), dtype=jnp.float32)
    x_len = jnp.array([16, 10], dtype=jnp.int32)

    out = streaming_mask(
        x, x_len, left_context=left_context, right_context=right_context
    )
    out = jax.block_until_ready(out)

    ref = _reference(x, x_len, left_context, right_context)
    assert out.shape == (batch, 1, seq, seq), out.shape
    assert out.dtype == x.dtype, out.dtype
    assert jnp.array_equal(out, ref), "Pallas output mismatch vs reference"

    # x_len=None path (returns (1, 1, T, T) streaming-only mask).
    out_none = jax.block_until_ready(
        streaming_mask(x, None, left_context=left_context, right_context=right_context)
    )
    assert jnp.array_equal(out_none, _reference(x, None, left_context, right_context))

    # Multi-tile + ragged-edge path: T=200 with forced 64x128 tiles -> cdiv grid
    # with partial blocks on both the row and column edges.
    seq2 = 200
    x2 = jax.random.normal(key, (batch, channels, seq2), dtype=jnp.float32)
    x_len2 = jnp.array([200, 77], dtype=jnp.int32)
    out2 = jax.block_until_ready(
        streaming_mask(x2, x_len2, left_context=left_context,
                       right_context=right_context, tile_m=64, tile_n=128)
    )
    assert jnp.array_equal(out2, _reference(x2, x_len2, left_context, right_context))

    # bf16 output dtype with auto tiles at an unaligned T (old fallback hazard).
    x3 = x2.astype(jnp.bfloat16)
    out3 = jax.block_until_ready(
        streaming_mask(x3, x_len2, left_context=left_context,
                       right_context=right_context)
    )
    assert out3.dtype == jnp.bfloat16
    assert jnp.array_equal(out3, _reference(x3, x_len2, left_context, right_context))

    print("KERNEL_OK")
</pallas_src>

<mosaic_0001>
module attributes {stable_mosaic.version = 11 : i64} {
  func.func @_streaming_mask_kernel(%arg0: i32, %arg1: i32, %arg2: i32, %arg3: memref<2xi32, #tpu.memory_space<smem>>, %arg4: memref<1x16x16xf32, #tpu.memory_space<vmem>>) attributes {dimension_semantics = [#tpu.dimension_semantics<parallel>, #tpu.dimension_semantics<parallel>, #tpu.dimension_semantics<parallel>], iteration_bounds = array<i64: 1, 2, 1>, scalar_prefetch = 1 : i64, scratch_operands = 0 : i64, tpu.core_type = #tpu.core_type<tc>, window_params = [{transform_indices = @transform_0, window_bounds = array<i64: 1, 16, 16>}]} {
    %c16_i32 = arith.constant 16 : i32
    %0 = arith.muli %arg0, %c16_i32 : i32
    %c16_i32_0 = arith.constant 16 : i32
    %1 = arith.muli %arg2, %c16_i32_0 : i32
    %2 = tpu.iota {dimensions = array<i32: 1>} : vector<16x16xi32>
    %3 = tpu.iota {dimensions = array<i32: 0>} : vector<16x16xi32>
    %4 = arith.subi %1, %0 : i32
    %c4_i32 = arith.constant 4 : i32
    %5 = arith.addi %4, %c4_i32 : i32
    %6 = arith.subi %2, %3 : vector<16x16xi32>
    %7 = vector.broadcast %5 : i32 to vector<16x16xi32>
    %8 = arith.addi %6, %7 : vector<16x16xi32>
    %c6_i32 = arith.constant 6 : i32
    %9 = vector.broadcast %c6_i32 : i32 to vector<16x16xi32>
    %10 = arith.cmpi ugt, %8, %9 : vector<16x16xi32>
    %11 = arith.index_cast %arg1 : i32 to index
    %12 = memref.load %arg3[%11] : memref<2xi32, #tpu.memory_space<smem>>
    %13 = arith.subi %12, %1 : i32
    %14 = vector.broadcast %13 : i32 to vector<16x16xi32>
    %15 = arith.cmpi sge, %2, %14 : vector<16x16xi32>
    %16 = arith.ori %10, %15 : vector<16x16xi1>
    %17 = arith.extui %16 : vector<16x16xi1> to vector<16x16xi32>
    %18 = arith.sitofp %17 : vector<16x16xi32> to vector<16x16xf32>
    %c0 = arith.constant 0 : index
    %c0_1 = arith.constant 0 : index
    %c0_2 = arith.constant 0 : index
    %19 = vector.load %arg4[%c0, %c0_1, %c0_2] : memref<1x16x16xf32, #tpu.memory_space<vmem>>, vector<1x16x16xf32>
    %20 = vector.shape_cast %19 : vector<1x16x16xf32> to vector<16x16xf32>
    %21 = vector.shape_cast %18 : vector<16x16xf32> to vector<1x16x16xf32>
    tpu.vector_store %arg4[%c0, %c0_1, %c0_2], %21 {strides = array<i32>} : memref<1x16x16xf32, #tpu.memory_space<vmem>>, vector<1x16x16xf32>,
    return
  }
  func.func @transform_0(%arg0: i32, %arg1: i32, %arg2: i32, %arg3: memref<2xi32, #tpu.memory_space<smem>>) -> (i32, i32, i32) {
    %c0_i32 = arith.constant 0 : i32
    return %arg1, %arg0, %arg2 : i32, i32, i32
  }
}

</mosaic_0001>

<llo_original>
// kernel: tpu_custom_call.1
$region0: #{tpu_custom_call.1}
  #allocation0 [shape = 'u32[]', space=smem, size = 0x4, offset = 0x4, fixed_abs, tag = 'smem constant byte address 0x4 - core index']
  #allocation1 [shape = 'u32[144,128]{1,0:T(1,128)}', space=vmem, size = 0x12000, scoped, tag = 'internal scratch']
  #allocation2 [shape = 's32[1]{0}', space=sflag, size = 0x4, scoped, tag = 'scoped memory for tpu_custom_call.1']
  #allocation3 [shape = 'u8[512]{0}', space=smem, size = 0x200, scoped, tag = 'prefetched SMEM operand 0']
  %s0 = inlined_call_operand.hbm [shape: s32[2], index: 0, kind: input, shape index: {}]
  %s1 = inlined_call_operand.hbm [shape: f32[2,16,16], index: 1, kind: output, shape index: {}]
  %s2 = sld [smem:[#allocation0]]
  $region25: #{tpu_custom_call.1} parent=0
    _
  %s4 = ssub.s32 1, %s2
  %s5 = scalar_select 0, %s4, %s2
  %7 = dma.hbm_to_smem %s0, 16, [#allocation3], [#allocation2]
  %8 = dma.done [#allocation2], 16
  %9 = sfence
  $region1: #{tpu_custom_call.1} parent=0
    #allocation4 [shape = 'u8[16384]{0}', space=vmem, size = 0x4000, scoped, tag = 'output window, operand 0']
    #allocation5 [shape = 's32[2]{0}', space=sflag, size = 0x8, scoped, tag = 'scoped memory for tpu_custom_call.1']
    %10 = vsyncpa [#allocation5], 0
    %s11 = scalar_lea.sflag [#allocation5], 1
    %12 = vsyncpa %s11, 0
    loop: start=0, step=1, limit=3
    $region2: #{tpu_custom_call.1} parent=1 // loop_pre_header
      _
    $region3: #{tpu_custom_call.1} parent=1 // loop_header
      %s14 = sphi 0, %s18
      %p15 = scmp.ge.s32.totalorder %s14, 3
      %s20 = sphi 0, %s36
      %s21 = sphi 0, %s32
      %s22 = sphi 0, %s28
      %s23 = sphi 0, %s20
      %s24 = sphi 0, %s21
      %s25 = sphi 0, %s22
      %s43 = sphi 0, %s45
      %s46 = sphi 0, %s43
      %s56 = sphi 0, %s46
    $region4: #{tpu_custom_call.1} parent=1 // loop_header_branch
      %17 = sbr.rel (%p15) target = $region8
    $region5: #{tpu_custom_call.1} parent=1 // loop_body
      %s19 = ssub.s32 %s14, 1
      %s26 = sadd.s32 1, %s22
      %p27 = scmp.ge.s32.totalorder %s26, 1
      %s28 = scalar_select %p27, 0, %s26
      %s29 = sadd.s32 1, %s21
      %s30 = scalar_select %p27, %s29, %s21
      %p31 = scmp.ge.s32.totalorder %s30, 2
      %s32 = scalar_select %p31, 0, %s30
      %s33 = sadd.s32 1, %s20
      %s34 = scalar_select %p31, %s33, %s20
      %p35 = scmp.ge.s32.totalorder %s34, 1
      %s36 = scalar_select %p35, 0, %s34
      %s37 = ssub.s32 %s21, %s32
      %s38 = ssub.s32 %s20, %s36
      %s39 = sor.u32 %s37, %s38
      %s40 = ssub.s32 %s22, %s28
      %s41 = sor.u32 %s39, %s40
      %p42 = scmp.eq.s32.totalorder %s41, 0
      %s44 = sadd.s32 %s43, 1
      %s45 = scalar_select %p42, %s43, %s44
      %p47 = pneg %p42
      %p48 = scmp.eq.s32.totalorder %s14, 1
      %p49 = por %p47, %p48
      %p50 = scmp.ne.s32.totalorder %s43, %s46
      %p51 = scmp.eq.s32.totalorder %s14, 0
      %p52 = por %p50, %p51
      %p53 = scmp.ne.s32.totalorder %s43, %s46
      %p54 = scmp.eq.s32.totalorder %s19, 1
      %p55 = por %p53, %p54
      %p57 = scmp.ne.s32.totalorder %s46, %s56
      %p58 = scmp.eq.s32.totalorder %s19, 0
      %p59 = por %p57, %p58
      %p60 = scmp.lt.s32.totalorder %s14, 2
      // Predicated region
      $region9: #{tpu_custom_call.1} parent=5 // pred_check
        %p61 = pneg %p60
      $region10: #{tpu_custom_call.1} parent=5 // pred_check_branch
        %63 = sbr.rel (%p61) target = $region12
      $region11: #{tpu_custom_call.1} parent=5 // pred_region
        %p64 = pneg %p52
        %p65 = pneg %p49
        %s66 = sand.u32 %s43, 1
        %s67 = scalar_lea.sflag [#allocation5], %s66
        %s68 = sand.u32 %s43, 1
        %s69 = smul.addr %s68, 16
        %s70 = scalar_lea.vmem [#allocation4], %s69
        %s71 = smul.u32 2, %s20
        %s72 = smul.u32 %s20, 16
        %s73 = smul.u32 %s22, 16
        %v74 = vlaneseq
        %v75 = vand.u32 %v74, 127
        %v76 = vlaneseq
        %v77 = vshrl.u32 %v76, 7
        %v78 = vadd.s32 %v77, 8
        %s79 = ssub.s32 %s73, %s72
        %s80 = sadd.s32 %s79, 4
        %v81 = vsub.s32 %v75, %v77
        %v82 = vsub.s32 %v75, %v78
        %v83 = vstv %s80
        %v84 = vadd.s32 %v81, %v83
        %v85 = vadd.s32 %v82, %v83
        %vm86 = vcmp.gt.u32.totalorder %v84, 6
        %vm87 = vcmp.gt.u32.totalorder %v85, 6
        %s88 = sld [smem:[#allocation3 + %s21]]
        %s89 = ssub.s32 %s88, %s73
        %v90 = vstv %s89
        %vm91 = vcmp.ge.s32.totalorder %v75, %v90
        %vm92 = vmor %vm86, %vm91
        %vm93 = vmor %vm87, %vm91
        %v94 = vsel %vm92, 1, 0
        %v95 = vsel %vm93, 1, 0
        %v96 = vcvt.s32.f32 %v94
        %v97 = vcvt.s32.f32 %v95
        %vm98 = vcmask 130048
        %99 = vst.msk [vmem:[%s70] sm:$0xff] %vm98, %v96
        %100 = vst.msk [vmem:[%s70 + $0x8] sm:$0xff] %vm98, %v97
        %s101 = sand.u32 %s43, 1
        %s102 = scalar_lea.sflag [#allocation5], %s101
        %s103 = sand.u32 %s43, 1
        %s104 = smul.addr %s103, 16
        %s105 = scalar_lea.vmem [#allocation4], %s104
        // Predicated region
        $region13: #{tpu_custom_call.1} parent=11 // pred_check
          %p106 = pneg %p49
        $region14: #{tpu_custom_call.1} parent=11 // pred_check_branch
          %108 = sbr.rel (%p106) target = $region16
        $region15: #{tpu_custom_call.1} parent=11 // pred_region
          %s109 = smul.u32 2, %s20
          %s111 = ssub.s32 256, 256
          %112 = vsyncadd %s102, %s111
          %s113 = sadd.s32 %s22, %s109
          %s114 = smul.addr %s21, 2
          %s115 = sadd.s32 %s113, %s114
          %s116 = smul.addr %s115, 128
          %s117 = scalar_lea.hbm %s1, %s116
          %s118 = sshll.u32 %s105, 4
          %s119 = int_to_ptr.vmem [resolvable:$true] %s118
          %124 = dma.vmem_to_hbm [thread:$0]  %s119, 256, %s117, %s102, 128, 128, 8
        $region16: #{tpu_custom_call.1} parent=11 // pred_fallthru
          _
      $region12: #{tpu_custom_call.1} parent=5 // pred_fallthru
        _
      %p125 = scmp.le.s32.totalorder 1, %s14
      // Predicated region
      $region17: #{tpu_custom_call.1} parent=5 // pred_check
        %p126 = pneg %p125
      $region18: #{tpu_custom_call.1} parent=5 // pred_check_branch
        %128 = sbr.rel (%p126) target = $region20
      $region19: #{tpu_custom_call.1} parent=5 // pred_region
        %s129 = ssub.s32 %s14, 1
        // Predicated region
        $region21: #{tpu_custom_call.1} parent=19 // pred_check
          %p130 = pneg %p55
        $region22: #{tpu_custom_call.1} parent=19 // pred_check_branch
          %132 = sbr.rel (%p130) target = $region24
        $region23: #{tpu_custom_call.1} parent=19 // pred_region
          %s133 = sand.u32 %s46, 1
          %s134 = scalar_lea.sflag [#allocation5], %s133
          %s135 = sand.u32 %s46, 1
          %s136 = smul.addr %s135, 16
          %s137 = scalar_lea.vmem [#allocation4], %s136
          %138 = dma.done %s134, 256
        $region24: #{tpu_custom_call.1} parent=19 // pred_fallthru
          _
      $region20: #{tpu_custom_call.1} parent=5 // pred_fallthru
        _
    $region6: #{tpu_custom_call.1} parent=1 // loop_footer
      %s18 = sadd.s32 1, %s14
    $region7: #{tpu_custom_call.1} parent=1 // loop_footer_branch
      %13 = sbr.rel target = $region3
    $region8: #{tpu_custom_call.1} parent=1 // loop_exit
      _
    %139 = vsyncpa [#allocation5], 1
    %s140 = scalar_lea.sflag [#allocation5], 1
    %141 = vsyncpa %s140, 1

</llo_original>
